<compile_context>
chip_gen: v6e
topology: v6e:2x2x1
jax: 0.10.0
libtpu: 0.0.40
codegen_flags: <defaults>
</compile_context>

<pallas_src>
import functools

import jax
import jax.numpy as jnp
from jax import lax
from jax.experimental import pallas as pl
from jax.experimental.pallas import tpu as pltpu

LN_EPS = 1e-5  # PyTorch nn.LayerNorm default


def _patch_embed_kernel(*refs, taps, tile_h, out_w, n_halo, inv_e):
    """One (batch, row-block) tile: multi-tap conv-as-matmul + bias + LayerNorm.

    refs = (x_main, *x_halo, w_taps, params, out, x_scratch)
      x_main   : (TILE_H, WG, Cp)          bf16  space-to-depth group rows of this block
      x_halo_r : (1, WG, Cp)               bf16  halo group row(s) just below the block
      w_taps   : (T, Cp, E)                bf16  per-tap weights (zeros where kh/kw > 2)
      params   : (3, E)                    f32   [conv bias; LN gamma; LN beta]
      out      : (TILE_H * OW, E)
      x_scratch: (TILE_H + n_halo, WG, Cp) bf16  VMEM scratch (main + halo, contiguous)
    """
    x_main = refs[0]
    x_halo = refs[1:1 + n_halo]
    w_ref = refs[1 + n_halo]
    p_ref = refs[2 + n_halo]
    o_ref = refs[3 + n_halo]
    xs_ref = refs[4 + n_halo]

    th = tile_h
    cp = w_ref.shape[1]
    e = w_ref.shape[2]
    m = th * out_w

    # Assemble main + halo group rows contiguously in VMEM so every tap below is a
    # plain static contiguous slice (cheap VMEM->VMEM copy).
    xs_ref[0:th] = x_main[...]
    for r, h_ref in enumerate(x_halo):
        xs_ref[th + r:th + r + 1] = h_ref[...]

    # Multi-tap accumulated matmul on the MXU, f32 accumulation.
    y = jnp.zeros((m, e), jnp.float32)
    for t, (dh, dw) in enumerate(taps):
        xt = xs_ref[dh:dh + th, dw:dw + out_w, :]          # (TILE_H, OW, Cp)
        y = y + jnp.dot(xt.reshape(m, cp), w_ref[t],
                        preferred_element_type=jnp.float32)
    y = y + p_ref[0:1, :]                                  # conv bias

    # LayerNorm over the exact embed dim E, two-pass variance (subtract mean first).
    mean = jnp.sum(y, axis=-1, keepdims=True) * inv_e
    yc = y - mean
    var = jnp.sum(yc * yc, axis=-1, keepdims=True) * inv_e
    inv = lax.rsqrt(var + LN_EPS)
    o_ref[...] = (yc * inv * p_ref[1:2, :] + p_ref[2:3, :]).astype(o_ref.dtype)


def _pick_tile_h(out_h, out_w, batch, target_m, prefer_even_steps):
    """Largest divisor of out_h whose tile (tile_h*out_w) fits the target and keeps the
    output block 8-aligned; prefers an even total grid-step count when asked (v7x)."""
    divs = [d for d in range(1, out_h + 1) if out_h % d == 0]
    valid = [d for d in divs if (d * out_w) % 8 == 0 or d == out_h]
    under = [d for d in valid if d * out_w <= target_m]
    pool = under if under else [min(valid)]
    if prefer_even_steps:
        even = [d for d in pool if (batch * (out_h // d)) % 2 == 0]
        if even:
            return max(even)
    return max(pool)


def patch_embed_forward(x, conv_w, conv_b, ln_g, ln_b, patch_size,
                        *, matmul_dtype=jnp.bfloat16, out_dtype=None):
    """x: (B, C, H, W); conv_w: (E, C, 3, 3); conv_b/ln_g/ln_b: (E,).
    Returns (B, num_patches, E) in out_dtype (default x.dtype)."""
    if isinstance(patch_size, int):
        patch_size = (patch_size, patch_size)
    B, C, H, W = x.shape
    E = conv_w.shape[0]
    sh, sw = patch_size
    out_h = (H + 2 - 3) // sh + 1
    out_w = (W + 2 - 3) // sw + 1
    num_patches = out_h * out_w
    out_dtype = x.dtype if out_dtype is None else out_dtype

    # Space-to-depth geometry: group row gh holds padded rows [gh*sh, gh*sh + sh).
    # Output row oh needs group rows oh .. oh + dh_max (dh_max = 2 // sh <= 2).
    dh_max = 2 // sh
    dw_max = 2 // sw
    hg = out_h + dh_max
    wg = out_w + dw_max
    cp = sh * sw * C
    tgt_h, tgt_w = hg * sh, wg * sw

    # --- glue: cast to bf16 first, then one pad + space-to-depth pass (~1x input) -----
    xh = jnp.transpose(x, (0, 2, 3, 1)).astype(matmul_dtype)            # NHWC
    pad_b = tgt_h - (H + 1)
    pad_r = tgt_w - (W + 1)
    xh = jnp.pad(xh, ((0, 0), (1, max(pad_b, 0)), (1, max(pad_r, 0)), (0, 0)))
    xh = xh[:, :tgt_h, :tgt_w, :]
    xg = xh.reshape(B, hg, sh, wg, sw, C).transpose(0, 1, 3, 2, 4, 5)
    xg = xg.reshape(B, hg, wg, cp)                                      # (B, HG, WG, Cp)

    # --- per-tap weights: W_tap[(ph, pw, c), e] = conv_w[e, c, dh*sh+ph, dw*sw+pw] -----
    taps = [(dh, dw) for dh in range(1 + dh_max) for dw in range(1 + dw_max)]
    wt = jnp.zeros((len(taps), sh, sw, C, E), jnp.float32)
    for t, (dh, dw) in enumerate(taps):
        for ph in range(sh):
            kh = dh * sh + ph
            if kh > 2:
                continue
            for pw in range(sw):
                kw = dw * sw + pw
                if kw > 2:
                    continue
                wt = wt.at[t, ph, pw].set(conv_w[:, :, kh, kw].astype(jnp.float32).T)
    wt = wt.reshape(len(taps), cp, E).astype(matmul_dtype)              # (T, Cp, E)
    params = jnp.stack([conv_b, ln_g, ln_b], axis=0).astype(jnp.float32)  # (3, E)

    # --- tiling: rows of patches per grid step -----------------------------------------
    kind = jax.devices()[0].device_kind.lower()
    is_v7 = ("v7" in kind) or ("7x" in kind)
    vmem_limit = (48 << 20) if is_v7 else (64 << 20)
    target_m = 1024 if is_v7 else 2048
    # Rough cap: ~4 live f32 copies of the (tile_m, E) accumulator/output in VMEM.
    target_m = min(target_m, max(256, (vmem_limit // 2) // max(E * 16, 1)))
    tile_h = _pick_tile_h(out_h, out_w, B, target_m, prefer_even_steps=is_v7)
    grid = (B, out_h // tile_h)

    kernel = functools.partial(
        _patch_embed_kernel, taps=tuple(taps), tile_h=tile_h, out_w=out_w,
        n_halo=dh_max, inv_e=1.0 / E)

    in_specs = [pl.BlockSpec((None, tile_h, wg, cp), lambda b, j: (b, j, 0, 0))]
    for r in range(dh_max):  # tiny halo rows just below the block (same array)
        in_specs.append(pl.BlockSpec(
            (None, 1, wg, cp),
            lambda b, j, rr=r: (b, (j + 1) * tile_h + rr, 0, 0)))
    in_specs += [
        pl.BlockSpec((len(taps), cp, E), lambda b, j: (0, 0, 0)),   # VMEM-resident
        pl.BlockSpec((3, E), lambda b, j: (0, 0)),                  # VMEM-resident
    ]

    out = pl.pallas_call(
        kernel,
        out_shape=jax.ShapeDtypeStruct((B, num_patches, E), out_dtype),
        grid_spec=pltpu.PrefetchScalarGridSpec(
            num_scalar_prefetch=0,
            grid=grid,
            in_specs=in_specs,
            out_specs=pl.BlockSpec((None, tile_h * out_w, E), lambda b, j: (b, j, 0)),
            scratch_shapes=[pltpu.VMEM((tile_h + dh_max, wg, cp), matmul_dtype)],
        ),
        compiler_params=pltpu.CompilerParams(
            dimension_semantics=("parallel", "parallel"),
            vmem_limit_bytes=vmem_limit,
        ),
    )(xg, *([xg] * dh_max), wt, params)
    return out


def _reference(x, conv_w, conv_b, ln_g, ln_b, patch_size):
    """Pure-JAX reference matching the PyTorch module (f32)."""
    y = lax.conv_general_dilated(
        x, conv_w, window_strides=patch_size, padding=((1, 1), (1, 1)),
        dimension_numbers=("NCHW", "OIHW", "NCHW"))
    y = y + conv_b[None, :, None, None]
    B, E, oh, ow = y.shape
    y = y.reshape(B, E, oh * ow).transpose(0, 2, 1)
    mu = y.mean(-1, keepdims=True)
    var = ((y - mu) ** 2).mean(-1, keepdims=True)
    return (y - mu) / jnp.sqrt(var + LN_EPS) * ln_g + ln_b


if __name__ == "__main__":
    # Small shapes consistent with the module: img 16x16, patch 2, C=4, E=32.
    B, C, H, W = 2, 4, 16, 16
    E = 32
    patch_size = (2, 2)

    key = jax.random.PRNGKey(0)
    kx, kw, kb, kg, kbeta = jax.random.split(key, 5)
    x = jax.random.normal(kx, (B, C, H, W), dtype=jnp.float32)
    conv_w = jax.random.normal(kw, (E, C, 3, 3), dtype=jnp.float32) * 0.05
    conv_b = jax.random.normal(kb, (E,), dtype=jnp.float32) * 0.05
    ln_g = jnp.ones((E,), dtype=jnp.float32) + 0.01 * jax.random.normal(kg, (E,), dtype=jnp.float32)
    ln_b = 0.01 * jax.random.normal(kbeta, (E,), dtype=jnp.float32)

    y = patch_embed_forward(x, conv_w, conv_b, ln_g, ln_b, patch_size)
    y = jax.block_until_ready(y)
    assert y.shape == (B, (H // 2) * (W // 2), E), y.shape
    assert bool(jnp.all(jnp.isfinite(y)))

    y_ref = _reference(x, conv_w, conv_b, ln_g, ln_b, patch_size)
    err = float(jnp.max(jnp.abs(y.astype(jnp.float32) - y_ref)))
    assert err < 1e-1, f"max abs error vs reference: {err}"
    print("KERNEL_OK")
</pallas_src>

<mosaic_0001>
module attributes {stable_mosaic.version = 11 : i64} {
  func.func @_patch_embed_kernel(%arg0: i32, %arg1: i32, %arg2: memref<1x8x9x16xbf16, #tpu.memory_space<vmem>>, %arg3: memref<1x1x9x16xbf16, #tpu.memory_space<vmem>>, %arg4: memref<4x16x32xbf16, #tpu.memory_space<vmem>>, %arg5: memref<3x32xf32, #tpu.memory_space<vmem>>, %arg6: memref<1x64x32xf32, #tpu.memory_space<vmem>>, %arg7: memref<9x9x16xbf16, #tpu.memory_space<vmem>>) attributes {dimension_semantics = [#tpu.dimension_semantics<parallel>, #tpu.dimension_semantics<parallel>], iteration_bounds = array<i64: 2, 1>, scalar_prefetch = 0 : i64, scratch_operands = 1 : i64, tpu.core_type = #tpu.core_type<tc>, window_params = [{transform_indices = @transform_0, window_bounds = array<i64: 1, 8, 9, 16>}, {transform_indices = @transform_1, window_bounds = array<i64: 1, 1, 9, 16>}, {pipeline_mode = #tpu.pipeline_mode<synchronous>, transform_indices = @transform_2, window_bounds = array<i64: 4, 16, 32>}, {pipeline_mode = #tpu.pipeline_mode<synchronous>, transform_indices = @transform_3, window_bounds = array<i64: 3, 32>}, {transform_indices = @transform_4, window_bounds = array<i64: 1, 64, 32>}]} {
    %c0 = arith.constant 0 : index
    %c0_0 = arith.constant 0 : index
    %c0_1 = arith.constant 0 : index
    %c0_2 = arith.constant 0 : index
    %0 = vector.load %arg2[%c0, %c0_0, %c0_1, %c0_2] : memref<1x8x9x16xbf16, #tpu.memory_space<vmem>>, vector<1x8x9x16xbf16>
    %1 = vector.shape_cast %0 : vector<1x8x9x16xbf16> to vector<8x9x16xbf16>
    %c0_3 = arith.constant 0 : index
    %c0_4 = arith.constant 0 : index
    %c0_5 = arith.constant 0 : index
    %2 = vector.load %arg7[%c0_3, %c0_4, %c0_5] : memref<9x9x16xbf16, #tpu.memory_space<vmem>>, vector<8x9x16xbf16>
    tpu.vector_store %arg7[%c0_3, %c0_4, %c0_5], %1 {strides = array<i32>} : memref<9x9x16xbf16, #tpu.memory_space<vmem>>, vector<8x9x16xbf16>,
    %c0_6 = arith.constant 0 : index
    %c0_7 = arith.constant 0 : index
    %c0_8 = arith.constant 0 : index
    %c0_9 = arith.constant 0 : index
    %3 = vector.load %arg3[%c0_6, %c0_7, %c0_8, %c0_9] : memref<1x1x9x16xbf16, #tpu.memory_space<vmem>>, vector<1x1x9x16xbf16>
    %4 = vector.shape_cast %3 : vector<1x1x9x16xbf16> to vector<1x9x16xbf16>
    %c8 = arith.constant 8 : index
    %c0_10 = arith.constant 0 : index
    %c0_11 = arith.constant 0 : index
    %5 = vector.load %arg7[%c8, %c0_10, %c0_11] : memref<9x9x16xbf16, #tpu.memory_space<vmem>>, vector<1x9x16xbf16>
    tpu.vector_store %arg7[%c8, %c0_10, %c0_11], %4 {strides = array<i32>} : memref<9x9x16xbf16, #tpu.memory_space<vmem>>, vector<1x9x16xbf16>,
    %cst = arith.constant 0.000000e+00 : f32
    %6 = vector.broadcast %cst : f32 to vector<64x32xf32>
    %c0_12 = arith.constant 0 : index
    %c0_13 = arith.constant 0 : index
    %c0_14 = arith.constant 0 : index
    %7 = vector.load %arg7[%c0_12, %c0_13, %c0_14] : memref<9x9x16xbf16, #tpu.memory_space<vmem>>, vector<8x8x16xbf16>
    %8 = vector.shape_cast %7 : vector<8x8x16xbf16> to vector<64x16xbf16>
    %c0_15 = arith.constant 0 : index
    %c0_16 = arith.constant 0 : index
    %c0_17 = arith.constant 0 : index
    %9 = vector.load %arg4[%c0_15, %c0_16, %c0_17] : memref<4x16x32xbf16, #tpu.memory_space<vmem>>, vector<1x16x32xbf16>
    %10 = vector.shape_cast %9 : vector<1x16x32xbf16> to vector<16x32xbf16>
    %cst_18 = arith.constant dense<0.000000e+00> : vector<64x32xf32>
    %11 = tpu.matmul %8, %10, %cst_18 {dimension_numbers = #tpu.dot_dimension_numbers<[1], [0], [0], [1], [0, 0, 1, 1], [], []>} : vector<64x16xbf16>, vector<16x32xbf16>, vector<64x32xf32> -> vector<64x32xf32>
    %12 = arith.addf %6, %11 : vector<64x32xf32>
    %c0_19 = arith.constant 0 : index
    %c1 = arith.constant 1 : index
    %c0_20 = arith.constant 0 : index
    %13 = vector.load %arg7[%c0_19, %c1, %c0_20] : memref<9x9x16xbf16, #tpu.memory_space<vmem>>, vector<8x8x16xbf16>
    %14 = vector.shape_cast %13 : vector<8x8x16xbf16> to vector<64x16xbf16>
    %c1_21 = arith.constant 1 : index
    %c0_22 = arith.constant 0 : index
    %c0_23 = arith.constant 0 : index
    %15 = vector.load %arg4[%c1_21, %c0_22, %c0_23] : memref<4x16x32xbf16, #tpu.memory_space<vmem>>, vector<1x16x32xbf16>
    %16 = vector.shape_cast %15 : vector<1x16x32xbf16> to vector<16x32xbf16>
    %cst_24 = arith.constant dense<0.000000e+00> : vector<64x32xf32>
    %17 = tpu.matmul %14, %16, %cst_24 {dimension_numbers = #tpu.dot_dimension_numbers<[1], [0], [0], [1], [0, 0, 1, 1], [], []>} : vector<64x16xbf16>, vector<16x32xbf16>, vector<64x32xf32> -> vector<64x32xf32>
    %18 = arith.addf %12, %17 : vector<64x32xf32>
    %c1_25 = arith.constant 1 : index
    %c0_26 = arith.constant 0 : index
    %c0_27 = arith.constant 0 : index
    %19 = vector.load %arg7[%c1_25, %c0_26, %c0_27] : memref<9x9x16xbf16, #tpu.memory_space<vmem>>, vector<8x8x16xbf16>
    %20 = vector.shape_cast %19 : vector<8x8x16xbf16> to vector<64x16xbf16>
    %c2 = arith.constant 2 : index
    %c0_28 = arith.constant 0 : index
    %c0_29 = arith.constant 0 : index
    %21 = vector.load %arg4[%c2, %c0_28, %c0_29] : memref<4x16x32xbf16, #tpu.memory_space<vmem>>, vector<1x16x32xbf16>
    %22 = vector.shape_cast %21 : vector<1x16x32xbf16> to vector<16x32xbf16>
    %cst_30 = arith.constant dense<0.000000e+00> : vector<64x32xf32>
    %23 = tpu.matmul %20, %22, %cst_30 {dimension_numbers = #tpu.dot_dimension_numbers<[1], [0], [0], [1], [0, 0, 1, 1], [], []>} : vector<64x16xbf16>, vector<16x32xbf16>, vector<64x32xf32> -> vector<64x32xf32>
    %24 = arith.addf %18, %23 : vector<64x32xf32>
    %c1_31 = arith.constant 1 : index
    %c1_32 = arith.constant 1 : index
    %c0_33 = arith.constant 0 : index
    %25 = vector.load %arg7[%c1_31, %c1_32, %c0_33] : memref<9x9x16xbf16, #tpu.memory_space<vmem>>, vector<8x8x16xbf16>
    %26 = vector.shape_cast %25 : vector<8x8x16xbf16> to vector<64x16xbf16>
    %c3 = arith.constant 3 : index
    %c0_34 = arith.constant 0 : index
    %c0_35 = arith.constant 0 : index
    %27 = vector.load %arg4[%c3, %c0_34, %c0_35] : memref<4x16x32xbf16, #tpu.memory_space<vmem>>, vector<1x16x32xbf16>
    %28 = vector.shape_cast %27 : vector<1x16x32xbf16> to vector<16x32xbf16>
    %cst_36 = arith.constant dense<0.000000e+00> : vector<64x32xf32>
    %29 = tpu.matmul %26, %28, %cst_36 {dimension_numbers = #tpu.dot_dimension_numbers<[1], [0], [0], [1], [0, 0, 1, 1], [], []>} : vector<64x16xbf16>, vector<16x32xbf16>, vector<64x32xf32> -> vector<64x32xf32>
    %30 = arith.addf %24, %29 : vector<64x32xf32>
    %c0_37 = arith.constant 0 : index
    %c0_38 = arith.constant 0 : index
    %31 = vector.load %arg5[%c0_37, %c0_38] : memref<3x32xf32, #tpu.memory_space<vmem>>, vector<1x32xf32>
    %32 = vector.broadcast %31 : vector<1x32xf32> to vector<64x32xf32>
    %33 = arith.addf %30, %32 : vector<64x32xf32>
    %cst_39 = arith.constant dense<0.000000e+00> : vector<64xf32>
    %34 = vector.multi_reduction <add>, %33, %cst_39 [1] : vector<64x32xf32> to vector<64xf32>
    %35 = vector.shape_cast %34 : vector<64xf32> to vector<64x1xf32>
    %cst_40 = arith.constant 3.125000e-02 : f32
    %36 = vector.broadcast %cst_40 : f32 to vector<64x1xf32>
    %37 = arith.mulf %35, %36 : vector<64x1xf32>
    %38 = vector.broadcast %37 : vector<64x1xf32> to vector<64x32xf32>
    %39 = arith.subf %33, %38 : vector<64x32xf32>
    %40 = arith.mulf %39, %39 : vector<64x32xf32>
    %cst_41 = arith.constant dense<0.000000e+00> : vector<64xf32>
    %41 = vector.multi_reduction <add>, %40, %cst_41 [1] : vector<64x32xf32> to vector<64xf32>
    %42 = vector.shape_cast %41 : vector<64xf32> to vector<64x1xf32>
    %cst_42 = arith.constant 3.125000e-02 : f32
    %43 = vector.broadcast %cst_42 : f32 to vector<64x1xf32>
    %44 = arith.mulf %42, %43 : vector<64x1xf32>
    %cst_43 = arith.constant 9.99999974E-6 : f32
    %45 = vector.broadcast %cst_43 : f32 to vector<64x1xf32>
    %46 = arith.addf %44, %45 : vector<64x1xf32>
    %47 = math.rsqrt %46 : vector<64x1xf32>
    %48 = vector.broadcast %47 : vector<64x1xf32> to vector<64x32xf32>
    %49 = arith.mulf %39, %48 : vector<64x32xf32>
    %c1_44 = arith.constant 1 : index
    %c0_45 = arith.constant 0 : index
    %50 = vector.load %arg5[%c1_44, %c0_45] : memref<3x32xf32, #tpu.memory_space<vmem>>, vector<1x32xf32>
    %51 = vector.broadcast %50 : vector<1x32xf32> to vector<64x32xf32>
    %52 = arith.mulf %49, %51 : vector<64x32xf32>
    %c2_46 = arith.constant 2 : index
    %c0_47 = arith.constant 0 : index
    %53 = vector.load %arg5[%c2_46, %c0_47] : memref<3x32xf32, #tpu.memory_space<vmem>>, vector<1x32xf32>
    %54 = vector.broadcast %53 : vector<1x32xf32> to vector<64x32xf32>
    %55 = arith.addf %52, %54 : vector<64x32xf32>
    %c0_48 = arith.constant 0 : index
    %c0_49 = arith.constant 0 : index
    %c0_50 = arith.constant 0 : index
    %56 = vector.load %arg6[%c0_48, %c0_49, %c0_50] : memref<1x64x32xf32, #tpu.memory_space<vmem>>, vector<1x64x32xf32>
    %57 = vector.shape_cast %56 : vector<1x64x32xf32> to vector<64x32xf32>
    %58 = vector.shape_cast %55 : vector<64x32xf32> to vector<1x64x32xf32>
    tpu.vector_store %arg6[%c0_48, %c0_49, %c0_50], %58 {strides = array<i32>} : memref<1x64x32xf32, #tpu.memory_space<vmem>>, vector<1x64x32xf32>,
    return
  }
  func.func @transform_0(%arg0: i32, %arg1: i32) -> (i32, i32, i32, i32) {
    %c0_i32 = arith.constant 0 : i32
    %c0_i32_0 = arith.constant 0 : i32
    %c0_i32_1 = arith.constant 0 : i32
    return %arg0, %arg1, %c0_i32, %c0_i32_0 : i32, i32, i32, i32
  }
  func.func @transform_1(%arg0: i32, %arg1: i32) -> (i32, i32, i32, i32) {
    %c1_i32 = arith.constant 1 : i32
    %0 = arith.addi %arg1, %c1_i32 : i32
    %c8_i32 = arith.constant 8 : i32
    %1 = arith.muli %0, %c8_i32 : i32
    %c0_i32 = arith.constant 0 : i32
    %2 = arith.addi %1, %c0_i32 : i32
    %c0_i32_0 = arith.constant 0 : i32
    %c0_i32_1 = arith.constant 0 : i32
    %c0_i32_2 = arith.constant 0 : i32
    return %arg0, %2, %c0_i32_0, %c0_i32_1 : i32, i32, i32, i32
  }
  func.func @transform_2(%arg0: i32, %arg1: i32) -> (i32, i32, i32) {
    %c0_i32 = arith.constant 0 : i32
    %c0_i32_0 = arith.constant 0 : i32
    %c0_i32_1 = arith.constant 0 : i32
    %c0_i32_2 = arith.constant 0 : i32
    return %c0_i32, %c0_i32_0, %c0_i32_1 : i32, i32, i32
  }
  func.func @transform_3(%arg0: i32, %arg1: i32) -> (i32, i32) {
    %c0_i32 = arith.constant 0 : i32
    %c0_i32_0 = arith.constant 0 : i32
    %c0_i32_1 = arith.constant 0 : i32
    return %c0_i32, %c0_i32_0 : i32, i32
  }
  func.func @transform_4(%arg0: i32, %arg1: i32) -> (i32, i32, i32) {
    %c0_i32 = arith.constant 0 : i32
    %c0_i32_0 = arith.constant 0 : i32
    return %arg0, %arg1, %c0_i32 : i32, i32, i32
  }
}

</mosaic_0001>

<llo_original>
// kernel: tpu_custom_call.1
$region0: #{tpu_custom_call.1}
  #allocation0 [shape = 'u32[]', space=smem, size = 0x4, offset = 0x4, fixed_abs, tag = 'smem constant byte address 0x4 - core index']
  #allocation1 [shape = 'u32[144,128]{1,0:T(1,128)}', space=vmem, size = 0x12000, scoped, tag = 'internal scratch']
  #allocation2 [shape = 'bf16[9,9,16]{2,1,0:T(8,128)(2,1)}', space=vmem, size = 0x9000, scoped, tag = 'scratch operand']
  %s0 = inlined_call_operand.vmem [shape: bf16[2,9,9,16], index: 0, kind: input, shape index: {}]
  %s1 = inlined_call_operand.vmem [shape: bf16[2,9,9,16], index: 1, kind: input, shape index: {}]
  %s2 = inlined_call_operand.vmem [shape: bf16[4,16,32], index: 2, kind: input, shape index: {}]
  %s3 = inlined_call_operand.vmem [shape: f32[3,32], index: 3, kind: input, shape index: {}]
  %s4 = inlined_call_operand.vmem [shape: f32[2,64,32], index: 4, kind: output, shape index: {}]
  %s5 = sld [smem:[#allocation0]]
  $region49: #{tpu_custom_call.1} parent=0
    _
  %s7 = ssub.s32 1, %s5
  %s8 = scalar_select 0, %s7, %s5
  loop: start=0, step=1, limit=4
  $region2: #{tpu_custom_call.1} parent=0 // loop_pre_header
    _
  $region3: #{tpu_custom_call.1} parent=0 // loop_header
    %s10 = sphi 0, %s14
    %p11 = scmp.ge.s32.totalorder %s10, 4
    %s17 = sphi 0, %s29
    %s18 = sphi 0, %s25
    %s19 = sphi 0, %s17
    %s20 = sphi 0, %s18
    %s21 = sphi 0, %s19
    %s22 = sphi 0, %s20
    %s34 = sphi 0, %s36
    %s37 = sphi 0, %s34
    %s38 = sphi 0, %s37
    %s54 = sphi 0, %s38
    %s66 = sphi 0, %s68
    %s69 = sphi 0, %s66
    %s70 = sphi 0, %s69
    %s86 = sphi 0, %s70
    %s90 = sphi 0, %s90
    %s92 = sphi 0, %s90
    %s93 = sphi 0, %s92
    %s107 = sphi 0, %s93
    %s111 = sphi 0, %s111
    %s113 = sphi 0, %s111
    %s114 = sphi 0, %s113
    %s128 = sphi 0, %s114
    %s136 = sphi 0, %s138
    %s139 = sphi 0, %s136
    %s140 = sphi 0, %s139
    %s156 = sphi 0, %s140
  $region4: #{tpu_custom_call.1} parent=0 // loop_header_branch
    %13 = sbr.rel (%p11) target = $region8
  $region5: #{tpu_custom_call.1} parent=0 // loop_body
    %s15 = ssub.s32 %s10, 1
    %s16 = ssub.s32 %s10, 2
    %s23 = sadd.s32 1, %s18
    %p24 = scmp.ge.s32.totalorder %s23, 1
    %s25 = scalar_select %p24, 0, %s23
    %s26 = sadd.s32 1, %s17
    %s27 = scalar_select %p24, %s26, %s17
    %p28 = scmp.ge.s32.totalorder %s27, 2
    %s29 = scalar_select %p28, 0, %s27
    %s30 = ssub.s32 %s17, %s29
    %s31 = ssub.s32 %s18, %s25
    %s32 = sor.u32 %s30, %s31
    %p33 = scmp.eq.s32.totalorder %s32, 0
    %s35 = sadd.s32 %s34, 1
    %s36 = scalar_select %p33, %s34, %s35
    %p39 = pneg %p33
    %p40 = scmp.eq.s32.totalorder %s10, 1
    %p41 = por %p39, %p40
    %p42 = scmp.ne.s32.totalorder %s34, %s37
    %p43 = scmp.eq.s32.totalorder %s10, 0
    %p44 = por %p42, %p43
    %p45 = scmp.ne.s32.totalorder %s34, %s37
    %p46 = scmp.eq.s32.totalorder %s15, 1
    %p47 = por %p45, %p46
    %p48 = scmp.ne.s32.totalorder %s37, %s38
    %p49 = scmp.eq.s32.totalorder %s15, 0
    %p50 = por %p48, %p49
    %p51 = scmp.ne.s32.totalorder %s37, %s38
    %p52 = scmp.eq.s32.totalorder %s16, 1
    %p53 = por %p51, %p52
    %p55 = scmp.ne.s32.totalorder %s38, %s54
    %p56 = scmp.eq.s32.totalorder %s16, 0
    %p57 = por %p55, %p56
    %s58 = sadd.s32 %s18, 1
    %s59 = smul.u32 %s58, 8
    %s60 = sadd.s32 %s25, 1
    %s61 = smul.u32 %s60, 8
    %s62 = ssub.s32 %s17, %s29
    %s63 = ssub.s32 %s59, %s61
    %s64 = sor.u32 %s62, %s63
    %p65 = scmp.eq.s32.totalorder %s64, 0
    %s67 = sadd.s32 %s66, 1
    %s68 = scalar_select %p65, %s66, %s67
    %p71 = pneg %p65
    %p72 = scmp.eq.s32.totalorder %s10, 1
    %p73 = por %p71, %p72
    %p74 = scmp.ne.s32.totalorder %s66, %s69
    %p75 = scmp.eq.s32.totalorder %s10, 0
    %p76 = por %p74, %p75
    %p77 = scmp.ne.s32.totalorder %s66, %s69
    %p78 = scmp.eq.s32.totalorder %s15, 1
    %p79 = por %p77, %p78
    %p80 = scmp.ne.s32.totalorder %s69, %s70
    %p81 = scmp.eq.s32.totalorder %s15, 0
    %p82 = por %p80, %p81
    %p83 = scmp.ne.s32.totalorder %s69, %s70
    %p84 = scmp.eq.s32.totalorder %s16, 1
    %p85 = por %p83, %p84
    %p87 = scmp.ne.s32.totalorder %s70, %s86
    %p88 = scmp.eq.s32.totalorder %s16, 0
    %p89 = por %p87, %p88
    %s91 = sadd.s32 %s90, 1
    %p94 = scmp.eq.s32.totalorder %s10, 1
    %p95 = scmp.ne.s32.totalorder %s90, %s92
    %p96 = scmp.eq.s32.totalorder %s10, 0
    %p97 = por %p95, %p96
    %p98 = scmp.ne.s32.totalorder %s90, %s92
    %p99 = scmp.eq.s32.totalorder %s15, 1
    %p100 = por %p98, %p99
    %p101 = scmp.ne.s32.totalorder %s92, %s93
    %p102 = scmp.eq.s32.totalorder %s15, 0
    %p103 = por %p101, %p102
    %p104 = scmp.ne.s32.totalorder %s92, %s93
    %p105 = scmp.eq.s32.totalorder %s16, 1
    %p106 = por %p104, %p105
    %p108 = scmp.ne.s32.totalorder %s93, %s107
    %p109 = scmp.eq.s32.totalorder %s16, 0
    %p110 = por %p108, %p109
    %s112 = sadd.s32 %s111, 1
    %p115 = scmp.eq.s32.totalorder %s10, 1
    %p116 = scmp.ne.s32.totalorder %s111, %s113
    %p117 = scmp.eq.s32.totalorder %s10, 0
    %p118 = por %p116, %p117
    %p119 = scmp.ne.s32.totalorder %s111, %s113
    %p120 = scmp.eq.s32.totalorder %s15, 1
    %p121 = por %p119, %p120
    %p122 = scmp.ne.s32.totalorder %s113, %s114
    %p123 = scmp.eq.s32.totalorder %s15, 0
    %p124 = por %p122, %p123
    %p125 = scmp.ne.s32.totalorder %s113, %s114
    %p126 = scmp.eq.s32.totalorder %s16, 1
    %p127 = por %p125, %p126
    %p129 = scmp.ne.s32.totalorder %s114, %s128
    %p130 = scmp.eq.s32.totalorder %s16, 0
    %p131 = por %p129, %p130
    %s132 = ssub.s32 %s17, %s29
    %s133 = ssub.s32 %s18, %s25
    %s134 = sor.u32 %s132, %s133
    %p135 = scmp.eq.s32.totalorder %s134, 0
    %s137 = sadd.s32 %s136, 1
    %s138 = scalar_select %p135, %s136, %s137
    %p141 = pneg %p135
    %p142 = scmp.eq.s32.totalorder %s10, 1
    %p143 = por %p141, %p142
    %p144 = scmp.ne.s32.totalorder %s136, %s139
    %p145 = scmp.eq.s32.totalorder %s10, 0
    %p146 = por %p144, %p145
    %p147 = scmp.ne.s32.totalorder %s136, %s139
    %p148 = scmp.eq.s32.totalorder %s15, 1
    %p149 = por %p147, %p148
    %p150 = scmp.ne.s32.totalorder %s139, %s140
    %p151 = scmp.eq.s32.totalorder %s15, 0
    %p152 = por %p150, %p151
    %p153 = scmp.ne.s32.totalorder %s139, %s140
    %p154 = scmp.eq.s32.totalorder %s16, 1
    %p155 = por %p153, %p154
    %p157 = scmp.ne.s32.totalorder %s140, %s156
    %p158 = scmp.eq.s32.totalorder %s16, 0
    %p159 = por %p157, %p158
    %p160 = scmp.le.s32.totalorder 1, %s10
    %p161 = scmp.lt.s32.totalorder %s10, 3
    %p162 = pnand %p160, %p161
    %p163 = pneg %p162
    // Predicated region
    $region9: #{tpu_custom_call.1} parent=5 // pred_check
      _
    $region10: #{tpu_custom_call.1} parent=5 // pred_check_branch
      %165 = sbr.rel (%p162) target = $region12
    $region11: #{tpu_custom_call.1} parent=5 // pred_region
      %s166 = ssub.s32 %s10, 1
      // Predicated region
      $region13: #{tpu_custom_call.1} parent=11 // pred_check
        %p167 = pneg %p103
      $region14: #{tpu_custom_call.1} parent=11 // pred_check_branch
        %169 = sbr.rel (%p167) target = $region16
      $region15: #{tpu_custom_call.1} parent=11 // pred_region
        _
      $region16: #{tpu_custom_call.1} parent=11 // pred_fallthru
        _
      // Predicated region
      $region17: #{tpu_custom_call.1} parent=11 // pred_check
        %p170 = pneg %p124
      $region18: #{tpu_custom_call.1} parent=11 // pred_check_branch
        %172 = sbr.rel (%p170) target = $region20
      $region19: #{tpu_custom_call.1} parent=11 // pred_region
        _
      $region20: #{tpu_custom_call.1} parent=11 // pred_fallthru
        _
    $region12: #{tpu_custom_call.1} parent=5 // pred_fallthru
      _
    %p173 = scmp.lt.s32.totalorder %s10, 2
    // Predicated region
    $region21: #{tpu_custom_call.1} parent=5 // pred_check
      %p174 = pneg %p173
    $region22: #{tpu_custom_call.1} parent=5 // pred_check_branch
      %176 = sbr.rel (%p174) target = $region24
    $region23: #{tpu_custom_call.1} parent=5 // pred_region
      // Predicated region
      $region25: #{tpu_custom_call.1} parent=23 // pred_check
        %p177 = pneg %p44
      $region26: #{tpu_custom_call.1} parent=23 // pred_check_branch
        %179 = sbr.rel (%p177) target = $region28
      $region27: #{tpu_custom_call.1} parent=23 // pred_region
        %s180 = smul.u32 8, %s18
        %s181 = ssub.s32 9, %s180
        %p182 = scmp.lt.s32.totalorder %s181, 8
        %s183 = scalar_select %p182, %s181, 8
        %s184 = smul.u32 64, %s183
        %s185 = smul.u32 %s184, 2
        %p186 = scmp.lt.s32.totalorder %s17, 1
        %s187 = scalar_select %p186, %s17, 1
        %p188 = scmp.lt.s32.totalorder %s180, 8
        %s189 = scalar_select %p188, %s180, 8
        %s190 = smul.addr %s189, 2
        %s191 = smul.addr %s187, 18
        %s192 = sadd.s32 %s190, %s191
        %s193 = smul.addr %s192, 4
        %s194 = scalar_lea.vmem %s0, %s193
        %s195 = smul.u32 8, %s18
        %s196 = ssub.s32 9, %s195
        %p197 = scmp.lt.s32.totalorder %s196, 8
        %s198 = scalar_select %p197, %s196, 8
        %s199 = smul.u32 64, %s198
        %s200 = smul.u32 %s199, 2
      $region28: #{tpu_custom_call.1} parent=23 // pred_fallthru
        _
      // Predicated region
      $region29: #{tpu_custom_call.1} parent=23 // pred_check
        %p201 = pneg %p76
      $region30: #{tpu_custom_call.1} parent=23 // pred_check_branch
        %203 = sbr.rel (%p201) target = $region32
      $region31: #{tpu_custom_call.1} parent=23 // pred_region
        %s204 = sadd.s32 %s18, 1
        %s205 = smul.u32 %s204, 8
        %p206 = scmp.lt.s32.totalorder %s17, 1
        %s207 = scalar_select %p206, %s17, 1
        %p208 = scmp.lt.s32.totalorder %s205, 8
        %s209 = scalar_select %p208, %s205, 8
        %s210 = smul.addr %s209, 2
        %s211 = smul.addr %s207, 18
        %s212 = sadd.s32 %s210, %s211
        %s213 = smul.addr %s212, 4
        %s214 = scalar_lea.vmem %s1, %s213
        %s215 = sadd.s32 %s18, 1
        %s216 = smul.u32 %s215, 8
      $region32: #{tpu_custom_call.1} parent=23 // pred_fallthru
        _
    $region24: #{tpu_custom_call.1} parent=5 // pred_fallthru
      _
    %p217 = scmp.le.s32.totalorder 1, %s10
    %p218 = scmp.lt.s32.totalorder %s10, 3
    %p219 = pnand %p217, %p218
    %p220 = pneg %p219
    // Predicated region
    $region33: #{tpu_custom_call.1} parent=5 // pred_check
      _
    $region34: #{tpu_custom_call.1} parent=5 // pred_check_branch
      %222 = sbr.rel (%p219) target = $region36
    $region35: #{tpu_custom_call.1} parent=5 // pred_region
      %s223 = ssub.s32 %s10, 1
      %s224 = smul.u32 8, %s20
      %s225 = ssub.s32 9, %s224
      %p226 = scmp.lt.s32.totalorder %s225, 8
      %s227 = scalar_select %p226, %s225, 8
      %s228 = smul.u32 64, %s227
      %s229 = smul.u32 %s228, 2
      %p230 = scmp.lt.s32.totalorder %s19, 1
      %s231 = scalar_select %p230, %s19, 1
      %p232 = scmp.lt.s32.totalorder %s224, 8
      %s233 = scalar_select %p232, %s224, 8
      %s234 = smul.addr %s233, 2
      %s235 = smul.addr %s231, 18
      %s236 = sadd.s32 %s234, %s235
      %s237 = smul.addr %s236, 4
      %s238 = scalar_lea.vmem %s0, %s237
      %p239 = pneg %p50
      %p240 = pneg %p47
      %s241 = sadd.s32 %s20, 1
      %s242 = smul.u32 %s241, 8
      %p243 = scmp.lt.s32.totalorder %s19, 1
      %s244 = scalar_select %p243, %s19, 1
      %p245 = scmp.lt.s32.totalorder %s242, 8
      %s246 = scalar_select %p245, %s242, 8
      %s247 = smul.addr %s246, 2
      %s248 = smul.addr %s244, 18
      %s249 = sadd.s32 %s247, %s248
      %s250 = smul.addr %s249, 4
      %s251 = scalar_lea.vmem %s1, %s250
      %p252 = pneg %p82
      %p253 = pneg %p79
      %p254 = pneg %p103
      %p255 = pneg %p100
      %p256 = pneg %p124
      %p257 = pneg %p121
      %p258 = pneg %p152
      %p259 = pneg %p149
      %s260 = smul.u32 8, %s20
      %p261 = scmp.lt.s32.totalorder %s19, 1
      %s262 = scalar_select %p261, %s19, 1
      %p263 = scmp.lt.s32.totalorder %s260, 7
      %s264 = scalar_select %p263, %s260, 7
      %s265 = smul.addr %s262, 8
      %s266 = sadd.s32 %s264, %s265
      %s267 = smul.addr %s266, 8
      %s268 = scalar_lea.vmem %s4, %s267
      %s269 = smul.u32 8, %s20
      %s270 = ssub.s32 9, %s269
      %p271 = scmp.lt.s32.totalorder %s270, 8
      %s272 = scalar_select %p271, %s270, 8
      %s273 = smul.u32 64, %s272
      %s274 = smul.u32 %s273, 2
      %p275 = scmp.lt.s32.totalorder %s19, 1
      %s276 = scalar_select %p275, %s19, 1
      %p277 = scmp.lt.s32.totalorder %s269, 8
      %s278 = scalar_select %p277, %s269, 8
      %s279 = smul.addr %s278, 2
      %s280 = smul.addr %s276, 18
      %s281 = sadd.s32 %s279, %s280
      %s282 = smul.addr %s281, 4
      %s283 = scalar_lea.vmem %s0, %s282
      %s284 = smul.u32 8, %s20
      %s285 = ssub.s32 9, %s284
      %p286 = scmp.lt.s32.totalorder %s285, 8
      %s287 = scalar_select %p286, %s285, 8
      %s288 = smul.u32 64, %s287
      %s289 = smul.u32 %s288, 2
      %s290 = sadd.s32 %s20, 1
      %s291 = smul.u32 %s290, 8
      %p292 = scmp.lt.s32.totalorder %s19, 1
      %s293 = scalar_select %p292, %s19, 1
      %p294 = scmp.lt.s32.totalorder %s291, 8
      %s295 = scalar_select %p294, %s291, 8
      %s296 = smul.addr %s295, 2
      %s297 = smul.addr %s293, 18
      %s298 = sadd.s32 %s296, %s297
      %s299 = smul.addr %s298, 4
      %s300 = scalar_lea.vmem %s1, %s299
      %s301 = sadd.s32 %s20, 1
      %s302 = smul.u32 %s301, 8
      %s303 = smul.u32 8, %s20
      %p304 = scmp.lt.s32.totalorder %s19, 1
      %s305 = scalar_select %p304, %s19, 1
      %p306 = scmp.lt.s32.totalorder %s303, 7
      %s307 = scalar_select %p306, %s303, 7
      %s308 = smul.addr %s305, 8
      %s309 = sadd.s32 %s307, %s308
      %s310 = smul.addr %s309, 8
      %s311 = scalar_lea.vmem %s4, %s310
      %s312 = smul.u32 8, %s20
      %v314 = vld [vmem:[%s283] sm:$0xf]
      %v315 = vld [vmem:[%s283 + $0x4] sm:$0x1]
      %v316 = vld [vmem:[%s283 + $0x8] sm:$0xf]
      %v317 = vld [vmem:[%s283 + $0xc] sm:$0x1]
      %v318 = vld [vmem:[%s283 + $0x10] sm:$0xf]
      %v319 = vld [vmem:[%s283 + $0x14] sm:$0x1]
      %v320 = vld [vmem:[%s283 + $0x18] sm:$0xf]
      %v321 = vld [vmem:[%s283 + $0x1c] sm:$0x1]
      %v322 = vld [vmem:[%s283 + $0x20] sm:$0xf]
      %v323 = vld [vmem:[%s283 + $0x24] sm:$0x1]
      %v324 = vld [vmem:[%s283 + $0x28] sm:$0xf]
      %v325 = vld [vmem:[%s283 + $0x2c] sm:$0x1]
      %v326 = vld [vmem:[%s283 + $0x30] sm:$0xf]
      %v327 = vld [vmem:[%s283 + $0x34] sm:$0x1]
      %v328 = vld [vmem:[%s283 + $0x38] sm:$0xf]
      %v329 = vld [vmem:[%s283 + $0x3c] sm:$0x1]
      %vm330 = vcmask 125952
      %331 = vst.msk [vmem:[#allocation2] sm:$0xf] %vm330, %v314
      %vm332 = vcmask 122880
      %vm333 = vsmask.f32 256
      %vm334 = vmand %vm332, %vm333
      %v335 = vld [vmem:[#allocation2 + $0x4] sm:$0x1]
      %v336 = vsel %vm334, %v315, %v335
      %337 = vst [vmem:[#allocation2 + $0x4] sm:$0x1] %v336
      %338 = vst.msk [vmem:[#allocation2 + $0x8] sm:$0xf] %vm330, %v316
      %v339 = vld [vmem:[#allocation2 + $0xc] sm:$0x1]
      %v340 = vsel %vm334, %v317, %v339
      %341 = vst [vmem:[#allocation2 + $0xc] sm:$0x1] %v340
      %342 = vst.msk [vmem:[#allocation2 + $0x10] sm:$0xf] %vm330, %v318
      %v343 = vld [vmem:[#allocation2 + $0x14] sm:$0x1]
      %v344 = vsel %vm334, %v319, %v343
      %345 = vst [vmem:[#allocation2 + $0x14] sm:$0x1] %v344
      %346 = vst.msk [vmem:[#allocation2 + $0x18] sm:$0xf] %vm330, %v320
      %v347 = vld [vmem:[#allocation2 + $0x1c] sm:$0x1]
      %v348 = vsel %vm334, %v321, %v347
      %349 = vst [vmem:[#allocation2 + $0x1c] sm:$0x1] %v348
      %350 = vst.msk [vmem:[#allocation2 + $0x20] sm:$0xf] %vm330, %v322
      %v351 = vld [vmem:[#allocation2 + $0x24] sm:$0x1]
      %v352 = vsel %vm334, %v323, %v351
      %353 = vst [vmem:[#allocation2 + $0x24] sm:$0x1] %v352
      %354 = vst.msk [vmem:[#allocation2 + $0x28] sm:$0xf] %vm330, %v324
      %v355 = vld [vmem:[#allocation2 + $0x2c] sm:$0x1]
      %v356 = vsel %vm334, %v325, %v355
      %357 = vst [vmem:[#allocation2 + $0x2c] sm:$0x1] %v356
      %358 = vst.msk [vmem:[#allocation2 + $0x30] sm:$0xf] %vm330, %v326
      %v359 = vld [vmem:[#allocation2 + $0x34] sm:$0x1]
      %v360 = vsel %vm334, %v327, %v359
      %361 = vst [vmem:[#allocation2 + $0x34] sm:$0x1] %v360
      %362 = vst.msk [vmem:[#allocation2 + $0x38] sm:$0xf] %vm330, %v328
      %v363 = vld [vmem:[#allocation2 + $0x3c] sm:$0x1]
      %v364 = vsel %vm334, %v329, %v363
      %365 = vst [vmem:[#allocation2 + $0x3c] sm:$0x1] %v364
      %v366 = vld [vmem:[%s300] sm:$0xf]
      %v367 = vld [vmem:[%s300 + $0x4] sm:$0x1]
      %s368 = scalar_lea.vmem [#allocation2], 64
      %369 = vst.msk [vmem:[%s368] sm:$0xf] %vm330, %v366
      %v370 = vld [vmem:[%s368 + $0x4] sm:$0x1]
      %v371 = vsel %vm334, %v367, %v370
      %372 = vst [vmem:[%s368 + $0x4] sm:$0x1] %v371
      %v373 = vld [vmem:[#allocation2] sm:$0xf]
      %v374 = vld [vmem:[#allocation2 + $0x8] sm:$0xf]
      %v375 = vld [vmem:[#allocation2 + $0x10] sm:$0xf]
      %v376 = vld [vmem:[#allocation2 + $0x18] sm:$0xf]
      %v377 = vld [vmem:[#allocation2 + $0x20] sm:$0xf]
      %v378 = vld [vmem:[#allocation2 + $0x28] sm:$0xf]
      %v379 = vld [vmem:[#allocation2 + $0x30] sm:$0xf]
      %v380 = vld [vmem:[#allocation2 + $0x38] sm:$0xf]
      %v381 = vld [vmem:[%s2] sm:$0xf]
      %v382 = vld [vmem:[%s2 + $0x4] sm:$0xf]
      %v383 = vld [vmem:[#allocation2 + $0x4] sm:$0x1]
      %v384 = vld [vmem:[#allocation2 + $0xc] sm:$0x1]
      %v385 = vld [vmem:[#allocation2 + $0x14] sm:$0x1]
      %v386 = vld [vmem:[#allocation2 + $0x1c] sm:$0x1]
      %v387 = vld [vmem:[#allocation2 + $0x24] sm:$0x1]
      %v388 = vld [vmem:[#allocation2 + $0x2c] sm:$0x1]
      %v389 = vld [vmem:[#allocation2 + $0x34] sm:$0x1]
      %v390 = vld [vmem:[#allocation2 + $0x3c] sm:$0x1]
      %vm391 = vsmask.f32 3328
      %vm392 = vsmask.f32 7440
      %vm393 = vmor %vm391, %vm392
      %v395 = vshrl.u32 %v373, 16
      %v397 = vrot.slane %v395, 4
      %v398 = vshll.u32 %v373, 16
      %v400 = vrot.slane %v398, 5
      %v401 = vor.u32 %v397, %v400
      %v402 = vrot.slane %v401, 4
      %v404 = vshll.u32 %v383, 16
      %v406 = vrot.slane %v404, 5
      %v407 = vsel %vm393, %v402, %v406
      %v409 = vshrl.u32 %v374, 16
      %v411 = vrot.slane %v409, 4
      %v412 = vshll.u32 %v374, 16
      %v414 = vrot.slane %v412, 5
      %v415 = vor.u32 %v411, %v414
      %v416 = vrot.slane %v415, 4
      %v418 = vshll.u32 %v384, 16
      %v420 = vrot.slane %v418, 5
      %v421 = vsel %vm393, %v416, %v420
      %v423 = vshrl.u32 %v375, 16
      %v425 = vrot.slane %v423, 4
      %v426 = vshll.u32 %v375, 16
      %v428 = vrot.slane %v426, 5
      %v429 = vor.u32 %v425, %v428
      %v430 = vrot.slane %v429, 4
      %v432 = vshll.u32 %v385, 16
      %v434 = vrot.slane %v432, 5
      %v435 = vsel %vm393, %v430, %v434
      %v437 = vshrl.u32 %v376, 16
      %v439 = vrot.slane %v437, 4
      %v440 = vshll.u32 %v376, 16
      %v442 = vrot.slane %v440, 5
      %v443 = vor.u32 %v439, %v442
      %v444 = vrot.slane %v443, 4
      %v446 = vshll.u32 %v386, 16
      %v448 = vrot.slane %v446, 5
      %v449 = vsel %vm393, %v444, %v448
      %v451 = vshrl.u32 %v377, 16
      %v453 = vrot.slane %v451, 4
      %v454 = vshll.u32 %v377, 16
      %v456 = vrot.slane %v454, 5
      %v457 = vor.u32 %v453, %v456
      %v458 = vrot.slane %v457, 4
      %v460 = vshll.u32 %v387, 16
      %v462 = vrot.slane %v460, 5
      %v463 = vsel %vm393, %v458, %v462
      %v465 = vshrl.u32 %v378, 16
      %v467 = vrot.slane %v465, 4
      %v468 = vshll.u32 %v378, 16
      %v470 = vrot.slane %v468, 5
      %v471 = vor.u32 %v467, %v470
      %v472 = vrot.slane %v471, 4
      %v474 = vshll.u32 %v388, 16
      %v476 = vrot.slane %v474, 5
      %v477 = vsel %vm393, %v472, %v476
      %v479 = vshrl.u32 %v379, 16
      %v481 = vrot.slane %v479, 4
      %v482 = vshll.u32 %v379, 16
      %v484 = vrot.slane %v482, 5
      %v485 = vor.u32 %v481, %v484
      %v486 = vrot.slane %v485, 4
      %v488 = vshll.u32 %v389, 16
      %v490 = vrot.slane %v488, 5
      %v491 = vsel %vm393, %v486, %v490
      %v493 = vshrl.u32 %v380, 16
      %v495 = vrot.slane %v493, 4
      %v496 = vshll.u32 %v380, 16
      %v498 = vrot.slane %v496, 5
      %v499 = vor.u32 %v495, %v498
      %v500 = vrot.slane %v499, 4
      %v502 = vshll.u32 %v390, 16
      %v504 = vrot.slane %v502, 5
      %v505 = vsel %vm393, %v500, %v504
      %s506 = scalar_lea.vmem %s2, 8
      %v507 = vld [vmem:[%s506] sm:$0xf]
      %v508 = vld [vmem:[%s506 + $0x4] sm:$0xf]
      %v509 = vunpack.c.l.b16 %v407
      %v510 = vunpack.c.l.b16 %v421
      %v511 = vunpack.c.l.b16 %v435
      %v512 = vunpack.c.l.b16 %v449
      %v513 = vunpack.c.l.b16 %v463
      %v514 = vunpack.c.l.b16 %v477
      %v515 = vunpack.c.l.b16 %v491
      %v516 = vunpack.c.l.b16 %v505
      %v517 = vpack.c.b16 %v510, %v509
      %v518 = vpack.c.b16 %v512, %v511
      %v519 = vpack.c.b16 %v514, %v513
      %v520 = vpack.c.b16 %v516, %v515
      %v523 = vunpack.c.l.b16 %v507
      %v524 = vunpack.c.l.b16 %v508
      %v525 = vpack.c.b16 %v524, %v523
      %vm527 = vcmask 130048
      %v529 = vsel %vm527, %v517, 0
      %v532 = vsel %vm527, %v518, 0
      %v535 = vsel %vm527, %v519, 0
      %v538 = vsel %vm527, %v520, 0
      %540 = vmatprep.subr.bf16.mxu0 0
      %541 = vmatpush1.bf16.msra.mxu0 0
      %542 = vmatprep.subr.bf16.mxu0 0
      %543 = vmatpush1.bf16.msra.mxu0 0
      %544 = vmatprep.subr.bf16.mxu0 0
      %545 = vmatpush1.bf16.msra.mxu0 0
      %546 = vmatprep.subr.bf16.mxu0 0
      %547 = vmatpush1.bf16.msra.mxu0 0
      %548 = vmatprep.subr.bf16.mxu0 0
      %549 = vmatpush1.bf16.msra.mxu0 0
      %550 = vmatprep.subr.bf16.mxu0 0
      %551 = vmatpush1.bf16.msra.mxu0 0
      %552 = vmatprep.subr.bf16.mxu0 0
      %553 = vmatpush1.bf16.msra.mxu0 0
      %554 = vmatprep.subr.bf16.mxu0 0
      %555 = vmatpush1.bf16.msra.mxu0 %v525
      %556 = vmatprep.subr.bf16.mxu0 0
      %557 = vmatpush2.bf16.msra.mxu0 0
      %558 = vmatprep.subr.bf16.mxu0 0
      %559 = vmatpush2.bf16.msra.mxu0 0
      %560 = vmatprep.subr.bf16.mxu0 0
      %561 = vmatpush2.bf16.msra.mxu0 0
      %562 = vmatprep.subr.bf16.mxu0 0
      %563 = vmatpush2.bf16.msra.mxu0 0
      %564 = vmatprep.subr.bf16.mxu0 0
      %565 = vmatpush2.bf16.msra.mxu0 0
      %566 = vmatprep.subr.bf16.mxu0 0
      %567 = vmatpush2.bf16.msra.mxu0 0
      %568 = vmatprep.subr.bf16.mxu0 0
      %569 = vmatpush2.bf16.msra.mxu0 0
      %570 = vmatprep.subr.bf16.mxu0 0
      %571 = vmatpush2.bf16.msra.mxu0 0
      %572 = vmatprep.mubr.bf16.mxu0 0
      %573 = vmatmul.mubr.bf16.gmra.mxu0 %v529
      %v574 = vpop.f32.mrf.mxu0
      %v575 = vadd.f32 0.0, %v574
      %v576 = vpop.f32.mrf.mxu0
      %v577 = vpop.f32.mrf.mxu0
      %v578 = vadd.f32 0.0, %v577
      %v579 = vpop.f32.mrf.mxu0
      %580 = vmatprep.mubr.bf16.mxu0 0
      %581 = vmatmul.mubr.bf16.gmra.mxu0 %v532
      %v582 = vpop.f32.mrf.mxu0
      %v583 = vadd.f32 0.0, %v582
      %v584 = vpop.f32.mrf.mxu0
      %v585 = vpop.f32.mrf.mxu0
      %v586 = vadd.f32 0.0, %v585
      %v587 = vpop.f32.mrf.mxu0
      %588 = vmatprep.mubr.bf16.mxu0 0
      %589 = vmatmul.mubr.bf16.gmra.mxu0 %v535
      %v590 = vpop.f32.mrf.mxu0
      %v591 = vadd.f32 0.0, %v590
      %v592 = vpop.f32.mrf.mxu0
      %v593 = vpop.f32.mrf.mxu0
      %v594 = vadd.f32 0.0, %v593
      %v595 = vpop.f32.mrf.mxu0
      %596 = vmatprep.mubr.bf16.mxu0 0
      %597 = vmatmul.mubr.bf16.gmra.mxu0 %v538
      %v598 = vpop.f32.mrf.mxu0
      %v599 = vadd.f32 0.0, %v598
      %v600 = vpop.f32.mrf.mxu0
      %v601 = vpop.f32.mrf.mxu0
      %v602 = vadd.f32 0.0, %v601
      %v603 = vpop.f32.mrf.mxu0
      %604 = vdwg.mxu0
      %v613 = vunpack.c.l.b16 %v373
      %v614 = vunpack.c.l.b16 %v374
      %v615 = vunpack.c.l.b16 %v375
      %v616 = vunpack.c.l.b16 %v376
      %v617 = vunpack.c.l.b16 %v377
      %v618 = vunpack.c.l.b16 %v378
      %v619 = vunpack.c.l.b16 %v379
      %v620 = vunpack.c.l.b16 %v380
      %v621 = vpack.c.b16 %v614, %v613
      %v622 = vpack.c.b16 %v616, %v615
      %v623 = vpack.c.b16 %v618, %v617
      %v624 = vpack.c.b16 %v620, %v619
      %v627 = vunpack.c.l.b16 %v381
      %v628 = vunpack.c.l.b16 %v382
      %v629 = vpack.c.b16 %v628, %v627
      %v632 = vsel %vm527, %v621, 0
      %v635 = vsel %vm527, %v622, 0
      %v638 = vsel %vm527, %v623, 0
      %v641 = vsel %vm527, %v624, 0
      %643 = vmatprep.subr.bf16.mxu0 0
      %644 = vmatpush1.bf16.msra.mxu0 0
      %645 = vmatprep.subr.bf16.mxu0 0
      %646 = vmatpush1.bf16.msra.mxu0 0
      %647 = vmatprep.subr.bf16.mxu0 0
      %648 = vmatpush1.bf16.msra.mxu0 0
      %649 = vmatprep.subr.bf16.mxu0 0
      %650 = vmatpush1.bf16.msra.mxu0 0
      %651 = vmatprep.subr.bf16.mxu0 0
      %652 = vmatpush1.bf16.msra.mxu0 0
      %653 = vmatprep.subr.bf16.mxu0 0
      %654 = vmatpush1.bf16.msra.mxu0 0
      %655 = vmatprep.subr.bf16.mxu0 0
      %656 = vmatpush1.bf16.msra.mxu0 0
      %657 = vmatprep.subr.bf16.mxu0 0
      %658 = vmatpush1.bf16.msra.mxu0 %v629
      %659 = vmatprep.subr.bf16.mxu0 0
      %660 = vmatpush2.bf16.msra.mxu0 0
      %661 = vmatprep.subr.bf16.mxu0 0
      %662 = vmatpush2.bf16.msra.mxu0 0
      %663 = vmatprep.subr.bf16.mxu0 0
      %664 = vmatpush2.bf16.msra.mxu0 0
      %665 = vmatprep.subr.bf16.mxu0 0
      %666 = vmatpush2.bf16.msra.mxu0 0
      %667 = vmatprep.subr.bf16.mxu0 0
      %668 = vmatpush2.bf16.msra.mxu0 0
      %669 = vmatprep.subr.bf16.mxu0 0
      %670 = vmatpush2.bf16.msra.mxu0 0
      %671 = vmatprep.subr.bf16.mxu0 0
      %672 = vmatpush2.bf16.msra.mxu0 0
      %673 = vmatprep.subr.bf16.mxu0 0
      %674 = vmatpush2.bf16.msra.mxu0 0
      %675 = vmatprep.mubr.bf16.mxu0 0
      %676 = vmatmul.mubr.bf16.gmra.mxu0 %v632
      %v677 = vpop.f32.mrf.mxu0
      %v678 = vadd.f32 %v575, %v677
      %v679 = vpop.f32.mrf.mxu0
      %v680 = vpop.f32.mrf.mxu0
      %v681 = vadd.f32 %v578, %v680
      %v682 = vpop.f32.mrf.mxu0
      %683 = vmatprep.mubr.bf16.mxu0 0
      %684 = vmatmul.mubr.bf16.gmra.mxu0 %v635
      %v685 = vpop.f32.mrf.mxu0
      %v686 = vadd.f32 %v583, %v685
      %v687 = vpop.f32.mrf.mxu0
      %v688 = vpop.f32.mrf.mxu0
      %v689 = vadd.f32 %v586, %v688
      %v690 = vpop.f32.mrf.mxu0
      %691 = vmatprep.mubr.bf16.mxu0 0
      %692 = vmatmul.mubr.bf16.gmra.mxu0 %v638
      %v693 = vpop.f32.mrf.mxu0
      %v694 = vadd.f32 %v591, %v693
      %v695 = vpop.f32.mrf.mxu0
      %v696 = vpop.f32.mrf.mxu0
      %v697 = vadd.f32 %v594, %v696
      %v698 = vpop.f32.mrf.mxu0
      %699 = vmatprep.mubr.bf16.mxu0 0
      %700 = vmatmul.mubr.bf16.gmra.mxu0 %v641
      %v701 = vpop.f32.mrf.mxu0
      %v702 = vadd.f32 %v599, %v701
      %v703 = vpop.f32.mrf.mxu0
      %v704 = vpop.f32.mrf.mxu0
      %v705 = vadd.f32 %v602, %v704
      %v706 = vpop.f32.mrf.mxu0
      %707 = vdwg.mxu0
      %s708 = scalar_lea.vmem [#allocation2], 8
      %v709 = vld [vmem:[%s708] sm:$0xf]
      %v710 = vld [vmem:[%s708 + $0x8] sm:$0xf]
      %v711 = vld [vmem:[%s708 + $0x10] sm:$0xf]
      %v712 = vld [vmem:[%s708 + $0x18] sm:$0xf]
      %v713 = vld [vmem:[%s708 + $0x20] sm:$0xf]
      %v714 = vld [vmem:[%s708 + $0x28] sm:$0xf]
      %v715 = vld [vmem:[%s708 + $0x30] sm:$0xf]
      %v716 = vld [vmem:[%s708 + $0x38] sm:$0xf]
      %s717 = scalar_lea.vmem %s2, 16
      %v718 = vld [vmem:[%s717] sm:$0xf]
      %v719 = vld [vmem:[%s717 + $0x4] sm:$0xf]
      %v728 = vunpack.c.l.b16 %v709
      %v729 = vunpack.c.l.b16 %v710
      %v730 = vunpack.c.l.b16 %v711
      %v731 = vunpack.c.l.b16 %v712
      %v732 = vunpack.c.l.b16 %v713
      %v733 = vunpack.c.l.b16 %v714
      %v734 = vunpack.c.l.b16 %v715
      %v735 = vunpack.c.l.b16 %v716
      %v736 = vpack.c.b16 %v729, %v728
      %v737 = vpack.c.b16 %v731, %v730
      %v738 = vpack.c.b16 %v733, %v732
      %v739 = vpack.c.b16 %v735, %v734
      %v742 = vunpack.c.l.b16 %v718
      %v743 = vunpack.c.l.b16 %v719
      %v744 = vpack.c.b16 %v743, %v742
      %v747 = vsel %vm527, %v736, 0
      %v750 = vsel %vm527, %v737, 0
      %v753 = vsel %vm527, %v738, 0
      %v756 = vsel %vm527, %v739, 0
      %758 = vmatprep.subr.bf16.mxu0 0
      %759 = vmatpush1.bf16.msra.mxu0 0
      %760 = vmatprep.subr.bf16.mxu0 0
      %761 = vmatpush1.bf16.msra.mxu0 0
      %762 = vmatprep.subr.bf16.mxu0 0
      %763 = vmatpush1.bf16.msra.mxu0 0
      %764 = vmatprep.subr.bf16.mxu0 0
      %765 = vmatpush1.bf16.msra.mxu0 0
      %766 = vmatprep.subr.bf16.mxu0 0
      %767 = vmatpush1.bf16.msra.mxu0 0
      %768 = vmatprep.subr.bf16.mxu0 0
      %769 = vmatpush1.bf16.msra.mxu0 0
      %770 = vmatprep.subr.bf16.mxu0 0
      %771 = vmatpush1.bf16.msra.mxu0 0
      %772 = vmatprep.subr.bf16.mxu0 0
      %773 = vmatpush1.bf16.msra.mxu0 %v744
      %774 = vmatprep.subr.bf16.mxu0 0
      %775 = vmatpush2.bf16.msra.mxu0 0
      %776 = vmatprep.subr.bf16.mxu0 0
      %777 = vmatpush2.bf16.msra.mxu0 0
      %778 = vmatprep.subr.bf16.mxu0 0
      %779 = vmatpush2.bf16.msra.mxu0 0
      %780 = vmatprep.subr.bf16.mxu0 0
      %781 = vmatpush2.bf16.msra.mxu0 0
      %782 = vmatprep.subr.bf16.mxu0 0
      %783 = vmatpush2.bf16.msra.mxu0 0
      %784 = vmatprep.subr.bf16.mxu0 0
      %785 = vmatpush2.bf16.msra.mxu0 0
      %786 = vmatprep.subr.bf16.mxu0 0
      %787 = vmatpush2.bf16.msra.mxu0 0
      %788 = vmatprep.subr.bf16.mxu0 0
      %789 = vmatpush2.bf16.msra.mxu0 0
      %790 = vmatprep.mubr.bf16.mxu0 0
      %791 = vmatmul.mubr.bf16.gmra.mxu0 %v747
      %v792 = vpop.f32.mrf.mxu0
      %v793 = vadd.f32 0.0, %v792
      %v794 = vpop.f32.mrf.mxu0
      %v795 = vpop.f32.mrf.mxu0
      %v796 = vadd.f32 0.0, %v795
      %v797 = vpop.f32.mrf.mxu0
      %798 = vmatprep.mubr.bf16.mxu0 0
      %799 = vmatmul.mubr.bf16.gmra.mxu0 %v750
      %v800 = vpop.f32.mrf.mxu0
      %v801 = vadd.f32 0.0, %v800
      %v802 = vpop.f32.mrf.mxu0
      %v803 = vpop.f32.mrf.mxu0
      %v804 = vadd.f32 0.0, %v803
      %v805 = vpop.f32.mrf.mxu0
      %806 = vmatprep.mubr.bf16.mxu0 0
      %807 = vmatmul.mubr.bf16.gmra.mxu0 %v753
      %v808 = vpop.f32.mrf.mxu0
      %v809 = vadd.f32 0.0, %v808
      %v810 = vpop.f32.mrf.mxu0
      %v811 = vpop.f32.mrf.mxu0
      %v812 = vadd.f32 0.0, %v811
      %v813 = vpop.f32.mrf.mxu0
      %814 = vmatprep.mubr.bf16.mxu0 0
      %815 = vmatmul.mubr.bf16.gmra.mxu0 %v756
      %v816 = vpop.f32.mrf.mxu0
      %v817 = vadd.f32 0.0, %v816
      %v818 = vpop.f32.mrf.mxu0
      %v819 = vpop.f32.mrf.mxu0
      %v820 = vadd.f32 0.0, %v819
      %v821 = vpop.f32.mrf.mxu0
      %822 = vdwg.mxu0
      %v823 = vadd.f32 %v678, %v793
      %v824 = vadd.f32 %v681, %v796
      %v825 = vadd.f32 %v686, %v801
      %v826 = vadd.f32 %v689, %v804
      %v827 = vadd.f32 %v694, %v809
      %v828 = vadd.f32 %v697, %v812
      %v829 = vadd.f32 %v702, %v817
      %v830 = vadd.f32 %v705, %v820
      %v831 = vld [vmem:[%s708] sm:$0xf]
      %v832 = vld [vmem:[%s708 + $0x4] sm:$0x1]
      %v833 = vld [vmem:[%s708 + $0x8] sm:$0xf]
      %v834 = vld [vmem:[%s708 + $0xc] sm:$0x1]
      %v835 = vld [vmem:[%s708 + $0x10] sm:$0xf]
      %v836 = vld [vmem:[%s708 + $0x14] sm:$0x1]
      %v837 = vld [vmem:[%s708 + $0x18] sm:$0xf]
      %v838 = vld [vmem:[%s708 + $0x1c] sm:$0x1]
      %v839 = vld [vmem:[%s708 + $0x20] sm:$0xf]
      %v840 = vld [vmem:[%s708 + $0x24] sm:$0x1]
      %v841 = vld [vmem:[%s708 + $0x28] sm:$0xf]
      %v842 = vld [vmem:[%s708 + $0x2c] sm:$0x1]
      %v843 = vld [vmem:[%s708 + $0x30] sm:$0xf]
      %v844 = vld [vmem:[%s708 + $0x34] sm:$0x1]
      %v845 = vld [vmem:[%s708 + $0x38] sm:$0xf]
      %v846 = vld [vmem:[%s708 + $0x3c] sm:$0x1]
      %v848 = vshrl.u32 %v831, 16
      %v850 = vrot.slane %v848, 4
      %v851 = vshll.u32 %v831, 16
      %v853 = vrot.slane %v851, 5
      %v854 = vor.u32 %v850, %v853
      %v855 = vrot.slane %v854, 4
      %v857 = vshll.u32 %v832, 16
      %v859 = vrot.slane %v857, 5
      %v860 = vsel %vm393, %v855, %v859
      %v862 = vshrl.u32 %v833, 16
      %v864 = vrot.slane %v862, 4
      %v865 = vshll.u32 %v833, 16
      %v867 = vrot.slane %v865, 5
      %v868 = vor.u32 %v864, %v867
      %v869 = vrot.slane %v868, 4
      %v871 = vshll.u32 %v834, 16
      %v873 = vrot.slane %v871, 5
      %v874 = vsel %vm393, %v869, %v873
      %v876 = vshrl.u32 %v835, 16
      %v878 = vrot.slane %v876, 4
      %v879 = vshll.u32 %v835, 16
      %v881 = vrot.slane %v879, 5
      %v882 = vor.u32 %v878, %v881
      %v883 = vrot.slane %v882, 4
      %v885 = vshll.u32 %v836, 16
      %v887 = vrot.slane %v885, 5
      %v888 = vsel %vm393, %v883, %v887
      %v890 = vshrl.u32 %v837, 16
      %v892 = vrot.slane %v890, 4
      %v893 = vshll.u32 %v837, 16
      %v895 = vrot.slane %v893, 5
      %v896 = vor.u32 %v892, %v895
      %v897 = vrot.slane %v896, 4
      %v899 = vshll.u32 %v838, 16
      %v901 = vrot.slane %v899, 5
      %v902 = vsel %vm393, %v897, %v901
      %v904 = vshrl.u32 %v839, 16
      %v906 = vrot.slane %v904, 4
      %v907 = vshll.u32 %v839, 16
      %v909 = vrot.slane %v907, 5
      %v910 = vor.u32 %v906, %v909
      %v911 = vrot.slane %v910, 4
      %v913 = vshll.u32 %v840, 16
      %v915 = vrot.slane %v913, 5
      %v916 = vsel %vm393, %v911, %v915
      %v918 = vshrl.u32 %v841, 16
      %v920 = vrot.slane %v918, 4
      %v921 = vshll.u32 %v841, 16
      %v923 = vrot.slane %v921, 5
      %v924 = vor.u32 %v920, %v923
      %v925 = vrot.slane %v924, 4
      %v927 = vshll.u32 %v842, 16
      %v929 = vrot.slane %v927, 5
      %v930 = vsel %vm393, %v925, %v929
      %v932 = vshrl.u32 %v843, 16
      %v934 = vrot.slane %v932, 4
      %v935 = vshll.u32 %v843, 16
      %v937 = vrot.slane %v935, 5
      %v938 = vor.u32 %v934, %v937
      %v939 = vrot.slane %v938, 4
      %v941 = vshll.u32 %v844, 16
      %v943 = vrot.slane %v941, 5
      %v944 = vsel %vm393, %v939, %v943
      %v946 = vshrl.u32 %v845, 16
      %v948 = vrot.slane %v946, 4
      %v949 = vshll.u32 %v845, 16
      %v951 = vrot.slane %v949, 5
      %v952 = vor.u32 %v948, %v951
      %v953 = vrot.slane %v952, 4
      %v955 = vshll.u32 %v846, 16
      %v957 = vrot.slane %v955, 5
      %v958 = vsel %vm393, %v953, %v957
      %s959 = scalar_lea.vmem %s2, 24
      %v960 = vld [vmem:[%s959] sm:$0xf]
      %v961 = vld [vmem:[%s959 + $0x4] sm:$0xf]
      %v962 = vunpack.c.l.b16 %v860
      %v963 = vunpack.c.l.b16 %v874
      %v964 = vunpack.c.l.b16 %v888
      %v965 = vunpack.c.l.b16 %v902
      %v966 = vunpack.c.l.b16 %v916
      %v967 = vunpack.c.l.b16 %v930
      %v968 = vunpack.c.l.b16 %v944
      %v969 = vunpack.c.l.b16 %v958
      %v970 = vpack.c.b16 %v963, %v962
      %v971 = vpack.c.b16 %v965, %v964
      %v972 = vpack.c.b16 %v967, %v966
      %v973 = vpack.c.b16 %v969, %v968
      %v976 = vunpack.c.l.b16 %v960
      %v977 = vunpack.c.l.b16 %v961
      %v978 = vpack.c.b16 %v977, %v976
      %v981 = vsel %vm527, %v970, 0
      %v984 = vsel %vm527, %v971, 0
      %v987 = vsel %vm527, %v972, 0
      %v990 = vsel %vm527, %v973, 0
      %992 = vmatprep.subr.bf16.mxu0 0
      %993 = vmatpush1.bf16.msra.mxu0 0
      %994 = vmatprep.subr.bf16.mxu0 0
      %995 = vmatpush1.bf16.msra.mxu0 0
      %996 = vmatprep.subr.bf16.mxu0 0
      %997 = vmatpush1.bf16.msra.mxu0 0
      %998 = vmatprep.subr.bf16.mxu0 0
      %999 = vmatpush1.bf16.msra.mxu0 0
      %1000 = vmatprep.subr.bf16.mxu0 0
      %1001 = vmatpush1.bf16.msra.mxu0 0
      %1002 = vmatprep.subr.bf16.mxu0 0
      %1003 = vmatpush1.bf16.msra.mxu0 0
      %1004 = vmatprep.subr.bf16.mxu0 0
      %1005 = vmatpush1.bf16.msra.mxu0 0
      %1006 = vmatprep.subr.bf16.mxu0 0
      %1007 = vmatpush1.bf16.msra.mxu0 %v978
      %1008 = vmatprep.subr.bf16.mxu0 0
      %1009 = vmatpush2.bf16.msra.mxu0 0
      %1010 = vmatprep.subr.bf16.mxu0 0
      %1011 = vmatpush2.bf16.msra.mxu0 0
      %1012 = vmatprep.subr.bf16.mxu0 0
      %1013 = vmatpush2.bf16.msra.mxu0 0
      %1014 = vmatprep.subr.bf16.mxu0 0
      %1015 = vmatpush2.bf16.msra.mxu0 0
      %1016 = vmatprep.subr.bf16.mxu0 0
      %1017 = vmatpush2.bf16.msra.mxu0 0
      %1018 = vmatprep.subr.bf16.mxu0 0
      %1019 = vmatpush2.bf16.msra.mxu0 0
      %1020 = vmatprep.subr.bf16.mxu0 0
      %1021 = vmatpush2.bf16.msra.mxu0 0
      %1022 = vmatprep.subr.bf16.mxu0 0
      %1023 = vmatpush2.bf16.msra.mxu0 0
      %1024 = vmatprep.mubr.bf16.mxu0 0
      %1025 = vmatmul.mubr.bf16.gmra.mxu0 %v981
      %v1026 = vpop.f32.mrf.mxu0
      %v1027 = vadd.f32 0.0, %v1026
      %v1028 = vpop.f32.mrf.mxu0
      %v1029 = vpop.f32.mrf.mxu0
      %v1030 = vadd.f32 0.0, %v1029
      %v1031 = vpop.f32.mrf.mxu0
      %1032 = vmatprep.mubr.bf16.mxu0 0
      %1033 = vmatmul.mubr.bf16.gmra.mxu0 %v984
      %v1034 = vpop.f32.mrf.mxu0
      %v1035 = vadd.f32 0.0, %v1034
      %v1036 = vpop.f32.mrf.mxu0
      %v1037 = vpop.f32.mrf.mxu0
      %v1038 = vadd.f32 0.0, %v1037
      %v1039 = vpop.f32.mrf.mxu0
      %1040 = vmatprep.mubr.bf16.mxu0 0
      %1041 = vmatmul.mubr.bf16.gmra.mxu0 %v987
      %v1042 = vpop.f32.mrf.mxu0
      %v1043 = vadd.f32 0.0, %v1042
      %v1044 = vpop.f32.mrf.mxu0
      %v1045 = vpop.f32.mrf.mxu0
      %v1046 = vadd.f32 0.0, %v1045
      %v1047 = vpop.f32.mrf.mxu0
      %1048 = vmatprep.mubr.bf16.mxu0 0
      %1049 = vmatmul.mubr.bf16.gmra.mxu0 %v990
      %v1050 = vpop.f32.mrf.mxu0
      %v1051 = vadd.f32 0.0, %v1050
      %v1052 = vpop.f32.mrf.mxu0
      %v1053 = vpop.f32.mrf.mxu0
      %v1054 = vadd.f32 0.0, %v1053
      %v1055 = vpop.f32.mrf.mxu0
      %1056 = vdwg.mxu0
      %v1057 = vadd.f32 %v823, %v1027
      %v1058 = vadd.f32 %v824, %v1030
      %v1059 = vadd.f32 %v825, %v1035
      %v1060 = vadd.f32 %v826, %v1038
      %v1061 = vadd.f32 %v827, %v1043
      %v1062 = vadd.f32 %v828, %v1046
      %v1063 = vadd.f32 %v829, %v1051
      %v1064 = vadd.f32 %v830, %v1054
      %v1065 = vld [vmem:[%s3] sm:$0x1]
      %v1066 = vlaneseq
      %v1067 = vshrl.u32 %v1066, 7
      %v1068 = vsub.s32 0, %v1067
      %v1069 = vrot.slane %v1065, %v1068
      %v1070 = vadd.f32 %v1057, %v1069
      %v1071 = vadd.f32 %v1058, %v1069
      %v1072 = vadd.f32 %v1059, %v1069
      %v1073 = vadd.f32 %v1060, %v1069
      %v1074 = vadd.f32 %v1061, %v1069
      %v1075 = vadd.f32 %v1062, %v1069
      %v1076 = vadd.f32 %v1063, %v1069
      %v1077 = vadd.f32 %v1064, %v1069
      %vm1078 = vcmask 261120
      %v1079 = vsel %vm1078, %v1070, 0.0
      %1080 = vadd.xlane.f32.xlu0 %v1079
      %v1081 = vpop.xlane.xlu0 %1080
      %v1082 = vsel %vm1078, %v1071, 0.0
      %1083 = vadd.xlane.f32.xlu0 %v1082
      %v1084 = vpop.xlane.xlu0 %1083
      %v1085 = vsel %vm1078, %v1072, 0.0
      %1086 = vadd.xlane.f32.xlu0 %v1085
      %v1087 = vpop.xlane.xlu0 %1086
      %v1088 = vsel %vm1078, %v1073, 0.0
      %1089 = vadd.xlane.f32.xlu0 %v1088
      %v1090 = vpop.xlane.xlu0 %1089
      %v1091 = vsel %vm1078, %v1074, 0.0
      %1092 = vadd.xlane.f32.xlu0 %v1091
      %v1093 = vpop.xlane.xlu0 %1092
      %v1094 = vsel %vm1078, %v1075, 0.0
      %1095 = vadd.xlane.f32.xlu0 %v1094
      %v1096 = vpop.xlane.xlu0 %1095
      %v1097 = vsel %vm1078, %v1076, 0.0
      %1098 = vadd.xlane.f32.xlu0 %v1097
      %v1099 = vpop.xlane.xlu0 %1098
      %v1100 = vsel %vm1078, %v1077, 0.0
      %1101 = vadd.xlane.f32.xlu0 %v1100
      %v1102 = vpop.xlane.xlu0 %1101
      %v1103 = vmul.f32 %v1081, 0.03125
      %v1104 = vmul.f32 %v1084, 0.03125
      %v1105 = vmul.f32 %v1087, 0.03125
      %v1106 = vmul.f32 %v1090, 0.03125
      %v1107 = vmul.f32 %v1093, 0.03125
      %v1108 = vmul.f32 %v1096, 0.03125
      %v1109 = vmul.f32 %v1099, 0.03125
      %v1110 = vmul.f32 %v1102, 0.03125
      %v1111 = vsub.f32 %v1070, %v1103
      %v1112 = vsub.f32 %v1071, %v1104
      %v1113 = vsub.f32 %v1072, %v1105
      %v1114 = vsub.f32 %v1073, %v1106
      %v1115 = vsub.f32 %v1074, %v1107
      %v1116 = vsub.f32 %v1075, %v1108
      %v1117 = vsub.f32 %v1076, %v1109
      %v1118 = vsub.f32 %v1077, %v1110
      %v1119 = vmul.f32 %v1111, %v1111
      %v1120 = vmul.f32 %v1112, %v1112
      %v1121 = vmul.f32 %v1113, %v1113
      %v1122 = vmul.f32 %v1114, %v1114
      %v1123 = vmul.f32 %v1115, %v1115
      %v1124 = vmul.f32 %v1116, %v1116
      %v1125 = vmul.f32 %v1117, %v1117
      %v1126 = vmul.f32 %v1118, %v1118
      %v1127 = vsel %vm1078, %v1119, 0.0
      %1128 = vadd.xlane.f32.xlu0 %v1127
      %v1129 = vpop.xlane.xlu0 %1128
      %v1130 = vsel %vm1078, %v1120, 0.0
      %1131 = vadd.xlane.f32.xlu0 %v1130
      %v1132 = vpop.xlane.xlu0 %1131
      %v1133 = vsel %vm1078, %v1121, 0.0
      %1134 = vadd.xlane.f32.xlu0 %v1133
      %v1135 = vpop.xlane.xlu0 %1134
      %v1136 = vsel %vm1078, %v1122, 0.0
      %1137 = vadd.xlane.f32.xlu0 %v1136
      %v1138 = vpop.xlane.xlu0 %1137
      %v1139 = vsel %vm1078, %v1123, 0.0
      %1140 = vadd.xlane.f32.xlu0 %v1139
      %v1141 = vpop.xlane.xlu0 %1140
      %v1142 = vsel %vm1078, %v1124, 0.0
      %1143 = vadd.xlane.f32.xlu0 %v1142
      %v1144 = vpop.xlane.xlu0 %1143
      %v1145 = vsel %vm1078, %v1125, 0.0
      %1146 = vadd.xlane.f32.xlu0 %v1145
      %v1147 = vpop.xlane.xlu0 %1146
      %v1148 = vsel %vm1078, %v1126, 0.0
      %1149 = vadd.xlane.f32.xlu0 %v1148
      %v1150 = vpop.xlane.xlu0 %1149
      %v1151 = vmul.f32 %v1129, 0.03125
      %v1152 = vmul.f32 %v1132, 0.03125
      %v1153 = vmul.f32 %v1135, 0.03125
      %v1154 = vmul.f32 %v1138, 0.03125
      %v1155 = vmul.f32 %v1141, 0.03125
      %v1156 = vmul.f32 %v1144, 0.03125
      %v1157 = vmul.f32 %v1147, 0.03125
      %v1158 = vmul.f32 %v1150, 0.03125
      %v1159 = vadd.f32 %v1151, 1e-05
      %v1160 = vadd.f32 %v1152, 1e-05
      %v1161 = vadd.f32 %v1153, 1e-05
      %v1162 = vadd.f32 %v1154, 1e-05
      %v1163 = vadd.f32 %v1155, 1e-05
      %v1164 = vadd.f32 %v1156, 1e-05
      %v1165 = vadd.f32 %v1157, 1e-05
      %v1166 = vadd.f32 %v1158, 1e-05
      %v1167 = vrsqrt.pop %v1159
      %v1168 = vrsqrt.pop %v1160
      %v1169 = vrsqrt.pop %v1161
      %v1170 = vrsqrt.pop %v1162
      %v1171 = vrsqrt.pop %v1163
      %v1172 = vrsqrt.pop %v1164
      %v1173 = vrsqrt.pop %v1165
      %v1174 = vrsqrt.pop %v1166
      %v1175 = vmul.f32 %v1111, %v1167
      %v1176 = vmul.f32 %v1112, %v1168
      %v1177 = vmul.f32 %v1113, %v1169
      %v1178 = vmul.f32 %v1114, %v1170
      %v1179 = vmul.f32 %v1115, %v1171
      %v1180 = vmul.f32 %v1116, %v1172
      %v1181 = vmul.f32 %v1117, %v1173
      %v1182 = vmul.f32 %v1118, %v1174
      %v1183 = vld [vmem:[%s3 + $0x1] sm:$0x1]
      %v1184 = vlaneseq
      %v1185 = vshrl.u32 %v1184, 7
      %v1186 = vsub.s32 0, %v1185
      %v1187 = vrot.slane %v1183, %v1186
      %v1188 = vmul.f32 %v1175, %v1187
      %v1189 = vmul.f32 %v1176, %v1187
      %v1190 = vmul.f32 %v1177, %v1187
      %v1191 = vmul.f32 %v1178, %v1187
      %v1192 = vmul.f32 %v1179, %v1187
      %v1193 = vmul.f32 %v1180, %v1187
      %v1194 = vmul.f32 %v1181, %v1187
      %v1195 = vmul.f32 %v1182, %v1187
      %v1196 = vld [vmem:[%s3 + $0x2] sm:$0x1]
      %v1197 = vlaneseq
      %v1198 = vshrl.u32 %v1197, 7
      %v1199 = vsub.s32 0, %v1198
      %v1200 = vrot.slane %v1196, %v1199
      %v1201 = vadd.f32 %v1188, %v1200
      %v1202 = vadd.f32 %v1189, %v1200
      %v1203 = vadd.f32 %v1190, %v1200
      %v1204 = vadd.f32 %v1191, %v1200
      %v1205 = vadd.f32 %v1192, %v1200
      %v1206 = vadd.f32 %v1193, %v1200
      %v1207 = vadd.f32 %v1194, %v1200
      %v1208 = vadd.f32 %v1195, %v1200
      %1209 = vst.msk [vmem:[%s311] sm:$0xff] %vm1078, %v1201
      %1210 = vst.msk [vmem:[%s311 + $0x8] sm:$0xff] %vm1078, %v1202
      %1211 = vst.msk [vmem:[%s311 + $0x10] sm:$0xff] %vm1078, %v1203
      %1212 = vst.msk [vmem:[%s311 + $0x18] sm:$0xff] %vm1078, %v1204
      %1213 = vst.msk [vmem:[%s311 + $0x20] sm:$0xff] %vm1078, %v1205
      %1214 = vst.msk [vmem:[%s311 + $0x28] sm:$0xff] %vm1078, %v1206
      %1215 = vst.msk [vmem:[%s311 + $0x30] sm:$0xff] %vm1078, %v1207
      %1216 = vst.msk [vmem:[%s311 + $0x38] sm:$0xff] %vm1078, %v1208
      %s1217 = smul.u32 8, %s20
      %p1218 = scmp.lt.s32.totalorder %s19, 1
      %s1219 = scalar_select %p1218, %s19, 1
      %p1220 = scmp.lt.s32.totalorder %s1217, 7
      %s1221 = scalar_select %p1220, %s1217, 7
      %s1222 = smul.addr %s1219, 8
      %s1223 = sadd.s32 %s1221, %s1222
      %s1224 = smul.addr %s1223, 8
      %s1225 = scalar_lea.vmem %s4, %s1224
      // Predicated region
      $region37: #{tpu_custom_call.1} parent=35 // pred_check
        %p1226 = pneg %p149
      $region38: #{tpu_custom_call.1} parent=35 // pred_check_branch
        %1228 = sbr.rel (%p1226) target = $region40
      $region39: #{tpu_custom_call.1} parent=35 // pred_region
        %s1229 = smul.u32 8, %s20
      $region40: #{tpu_custom_call.1} parent=35 // pred_fallthru
        _
    $region36: #{tpu_custom_call.1} parent=5 // pred_fallthru
      _
    %p1230 = scmp.le.s32.totalorder 2, %s10
    // Predicated region
    $region41: #{tpu_custom_call.1} parent=5 // pred_check
      %p1231 = pneg %p1230
    $region42: #{tpu_custom_call.1} parent=5 // pred_check_branch
      %1233 = sbr.rel (%p1231) target = $region44
    $region43: #{tpu_custom_call.1} parent=5 // pred_region
      %s1234 = ssub.s32 %s10, 2
      // Predicated region
      $region45: #{tpu_custom_call.1} parent=43 // pred_check
        %p1235 = pneg %p155
      $region46: #{tpu_custom_call.1} parent=43 // pred_check_branch
        %1237 = sbr.rel (%p1235) target = $region48
      $region47: #{tpu_custom_call.1} parent=43 // pred_region
        %s1238 = smul.u32 8, %s22
        %p1239 = scmp.lt.s32.totalorder %s21, 1
        %s1240 = scalar_select %p1239, %s21, 1
        %p1241 = scmp.lt.s32.totalorder %s1238, 7
        %s1242 = scalar_select %p1241, %s1238, 7
        %s1243 = smul.addr %s1240, 8
        %s1244 = sadd.s32 %s1242, %s1243
        %s1245 = smul.addr %s1244, 8
        %s1246 = scalar_lea.vmem %s4, %s1245
      $region48: #{tpu_custom_call.1} parent=43 // pred_fallthru
        _
    $region44: #{tpu_custom_call.1} parent=5 // pred_fallthru
      _
  $region6: #{tpu_custom_call.1} parent=0 // loop_footer
    %s14 = sadd.s32 1, %s10
  $region7: #{tpu_custom_call.1} parent=0 // loop_footer_branch
    %9 = sbr.rel target = $region3
  $region8: #{tpu_custom_call.1} parent=0 // loop_exit
    _

</llo_original>
